<compile_context>
chip_gen: v7x
topology: tpu7x:2x2x1
jax: 0.10.0
libtpu: 0.0.40
codegen_flags: <defaults>
</compile_context>

<pallas_src>
import functools

import jax
import jax.numpy as jnp
from jax.experimental import pallas as pl
from jax.experimental.pallas import tpu as pltpu


def _round_up(x: int, m: int) -> int:
    return (x + m - 1) // m * m


@functools.lru_cache(maxsize=None)
def _tpu_defaults():
    """Generation-aware (tm, tn, tk, vmem_limit_bytes)."""
    try:
        vmem_bytes = int(pltpu.get_tpu_info().vmem_capacity_bytes)
    except Exception:
        vmem_bytes = 64 * 1024 * 1024  # conservative (v7x-like) fallback
    vmem_limit = min(48 * 1024 * 1024, (vmem_bytes * 3) // 4)
    if vmem_bytes >= 128 * 1024 * 1024:
        # v5e / v6e: big N/K tiles; ~10-18 MiB double-buffered VMEM, intensity
        # ~340 MAC/element -> compute-bound on v5e, near MXU roofline on v6e.
        return 512, 1024, 1024, vmem_limit
    # v7x: 64 MiB VMEM per TC but 3.2 TB/s HBM -> 512x512 output tiles already
    # saturate the MXU and shard better across the two TensorCores.
    return 512, 512, 1024, vmem_limit


def _largest_tile(padded_dim: int, tile_max: int, gran: int = 128) -> int:
    """Largest multiple of `gran` that divides padded_dim and is <= tile_max."""
    best = gran
    t = gran
    limit = min(tile_max, padded_dim)
    while t <= limit:
        if padded_dim % t == 0:
            best = t
        t += gran
    return best


def _row_granularity(dtype) -> int:
    # Packed sublanes per vreg: 8 for 4-byte, 16 for 2-byte, 32 for 1-byte.
    return max(8, 32 // jnp.dtype(dtype).itemsize)


def _apply_activation(y, activation):
    if activation == "relu":
        return jnp.maximum(y, 0.0)
    if activation == "leaky_relu":
        return jnp.where(y >= 0.0, y, 0.01 * y)  # PyTorch default slope 0.01
    if activation == "sigmoid":
        return jax.nn.sigmoid(y)
    return y  # activation is None -> identity


# ----------------------------- kernels --------------------------------------


def _linear_single_k_kernel(x_ref, w_ref, b_ref, o_ref, *, activation):
    # K fits in one tile: no accumulator scratch, no init/finalize branches.
    y = jnp.dot(x_ref[...], w_ref[...], preferred_element_type=jnp.float32)
    y = y + b_ref[...].astype(jnp.float32)
    o_ref[...] = _apply_activation(y, activation).astype(o_ref.dtype)


def _linear_acc_kernel(x_ref, w_ref, b_ref, o_ref, acc_ref, *, activation):
    # x_ref: [tm, tk] native dtype, w_ref: [tk, tn] pre-transposed weight,
    # b_ref: [1, tn], acc_ref: [tm, tn] f32, resident across the K grid axis.
    k = pl.program_id(2)

    @pl.when(k == 0)
    def _init():
        acc_ref[...] = jnp.zeros_like(acc_ref)

    acc_ref[...] += jnp.dot(x_ref[...], w_ref[...],
                            preferred_element_type=jnp.float32)

    @pl.when(k == pl.num_programs(2) - 1)
    def _finalize():
        y = acc_ref[...] + b_ref[...].astype(jnp.float32)
        o_ref[...] = _apply_activation(y, activation).astype(o_ref.dtype)


# ----------------------------- wrappers --------------------------------------


def prepare_linear_params(weight, bias, *, tn=None, tk=None):
    """One-time relayout of nn.Linear params to MXU-friendly padded [K, N].

    Hoists the weight transpose + pad out of the per-call path (inside jit the
    per-call version re-reads/re-writes the whole weight in HBM every call).
    """
    out_feats, in_feats = weight.shape
    tm_d, tn_d, tk_d, _ = _tpu_defaults()
    tn = tn_d if tn is None else tn
    tk = tk_d if tk is None else tk

    n_gran = 256 if out_feats >= 256 else 128  # v6e/v7x MXU is 256 lanes wide
    n_pad = _round_up(out_feats, n_gran)

    k_pad = _round_up(in_feats, 128)
    if k_pad > tk and _largest_tile(k_pad, tk) < 512:
        # Awkward K (e.g. 128 * prime): pad further so a large tk divides it;
        # trades a zero-pad of x's K per call for far fewer grid steps.
        k_pad = _round_up(in_feats, tk)

    w_kn = jnp.pad(weight.T, ((0, k_pad - in_feats), (0, n_pad - out_feats)))
    b_1n = jnp.pad(bias, (0, n_pad - out_feats)).reshape(1, n_pad)
    return w_kn, b_1n


def linear_block_apply(x, w_kn, b_1n, out_feats, activation=None,
                       *, tm=None, tn=None, tk=None):
    """y = activation(x @ W^T + b), W pre-relayouted by prepare_linear_params."""
    orig_shape = x.shape
    in_feats = orig_shape[-1]
    x2d = x.reshape(-1, in_feats)
    n_rows = x2d.shape[0]

    k_pad, n_pad = w_kn.shape
    assert k_pad >= in_feats and n_pad >= out_feats

    tm_d, tn_d, tk_d, vmem_limit = _tpu_defaults()
    tm = tm_d if tm is None else tm
    tn = tn_d if tn is None else tn
    tk = tk_d if tk is None else tk

    row_gran = _row_granularity(x.dtype)
    tm_eff = min(tm, _round_up(n_rows, row_gran))
    tn_eff = _largest_tile(n_pad, tn)
    tk_eff = _largest_tile(k_pad, tk)

    # Zero-pad K only (exactness); M is handled by Pallas partial-block masking
    # (garbage rows stay in out-of-bounds output rows whose writeback is dropped).
    if k_pad > in_feats:
        x2d = jnp.pad(x2d, ((0, 0), (0, k_pad - in_feats)))

    grid_m = pl.cdiv(n_rows, tm_eff)
    grid_n = n_pad // tn_eff
    grid_k = k_pad // tk_eff

    if grid_k == 1:
        kernel = functools.partial(_linear_single_k_kernel, activation=activation)
        grid = (grid_m, grid_n)
        in_specs = [
            pl.BlockSpec((tm_eff, k_pad), lambda i, j: (i, 0)),
            pl.BlockSpec((k_pad, tn_eff), lambda i, j: (0, j)),
            pl.BlockSpec((1, tn_eff), lambda i, j: (0, j)),
        ]
        out_specs = pl.BlockSpec((tm_eff, tn_eff), lambda i, j: (i, j))
        scratch_shapes = []
        dim_sem = ("parallel", "parallel")
    else:
        kernel = functools.partial(_linear_acc_kernel, activation=activation)
        grid = (grid_m, grid_n, grid_k)
        in_specs = [
            pl.BlockSpec((tm_eff, tk_eff), lambda i, j, k: (i, k)),
            # For small-M weight-streaming shapes, pipeline_mode=pl.Buffered(3)
            # on this spec can hide DMA jitter (sweep per chip / VMEM budget).
            pl.BlockSpec((tk_eff, tn_eff), lambda i, j, k: (k, j)),
            pl.BlockSpec((1, tn_eff), lambda i, j, k: (0, j)),
        ]
        out_specs = pl.BlockSpec((tm_eff, tn_eff), lambda i, j, k: (i, j))
        scratch_shapes = [pltpu.VMEM((tm_eff, tn_eff), jnp.float32)]
        dim_sem = ("parallel", "parallel", "arbitrary")

    out_padded = pl.pallas_call(
        kernel,
        out_shape=jax.ShapeDtypeStruct((n_rows, n_pad), x.dtype),
        grid_spec=pltpu.PrefetchScalarGridSpec(
            num_scalar_prefetch=0,
            grid=grid,
            in_specs=in_specs,
            out_specs=out_specs,
            scratch_shapes=scratch_shapes,
        ),
        compiler_params=pltpu.CompilerParams(
            dimension_semantics=dim_sem,
            vmem_limit_bytes=vmem_limit,
        ),
    )(x2d, w_kn, b_1n)

    out = out_padded[:, :out_feats]
    return out.reshape(orig_shape[:-1] + (out_feats,))


def linear_block(x, weight, bias, activation=None, *, tm=None, tn=None, tk=None):
    """Convenience path: relayouts the weight and applies.

    For hot loops, call prepare_linear_params() once at init time and reuse the
    result with linear_block_apply() so the weight transpose+pad is not redone
    (and re-streamed through HBM) on every forward call.
    """
    out_feats = weight.shape[0]
    w_kn, b_1n = prepare_linear_params(weight, bias, tn=tn, tk=tk)
    return linear_block_apply(x, w_kn, b_1n, out_feats,
                              activation=activation, tm=tm, tn=tn, tk=tk)


def _torch_linear_init(key, in_feats, out_feats, dtype=jnp.float32):
    """Deterministic init matching nn.Linear's default (uniform +/- 1/sqrt(K))."""
    k_w, k_b = jax.random.split(key)
    bound = 1.0 / jnp.sqrt(jnp.asarray(in_feats, jnp.float32))
    weight = jax.random.uniform(
        k_w, (out_feats, in_feats), dtype=jnp.float32,
        minval=-bound, maxval=bound).astype(dtype)
    bias = jax.random.uniform(
        k_b, (out_feats,), dtype=jnp.float32,
        minval=-bound, maxval=bound).astype(dtype)
    return weight, bias


if __name__ == "__main__":
    key = jax.random.PRNGKey(0)
    k1, k2, k3, k4, k5, k6 = jax.random.split(key, 6)

    # ---- 1) small f32 case (single-K fast path, relu) ----
    n, in_f, out_f = 16, 32, 32
    x = jax.random.normal(k1, (n, in_f), dtype=jnp.float32)
    w, b = _torch_linear_init(k2, in_f, out_f)
    out = jax.block_until_ready(linear_block(x, w, b, activation="relu"))
    ref = jnp.maximum(x @ w.T + b, 0.0)
    assert out.shape == (n, out_f)
    assert jnp.allclose(out, ref, atol=1e-5, rtol=1e-5)

    # ---- 2) bf16 case using the hoisted (prepared) weight path, sigmoid ----
    n2, in2, out2 = 512, 384, 256
    x2 = jax.random.normal(k3, (n2, in2), dtype=jnp.float32).astype(jnp.bfloat16)
    w2, b2 = _torch_linear_init(k4, in2, out2, dtype=jnp.bfloat16)
    w2_kn, b2_1n = prepare_linear_params(w2, b2)          # once, at "init time"
    out2_arr = jax.block_until_ready(
        linear_block_apply(x2, w2_kn, b2_1n, out2, activation="sigmoid"))
    ref2 = jax.nn.sigmoid(
        jnp.dot(x2, w2.T, preferred_element_type=jnp.float32)
        + b2.astype(jnp.float32)).astype(jnp.bfloat16)
    assert out2_arr.shape == (n2, out2)
    assert jnp.allclose(out2_arr.astype(jnp.float32),
                        ref2.astype(jnp.float32), atol=2e-2, rtol=2e-2)

    # ---- 3) ragged-M + multi-K accumulator path (small explicit tiles) ----
    n3, in3, out3 = 100, 256, 192
    x3 = jax.random.normal(k5, (n3, in3), dtype=jnp.float32)
    w3, b3 = _torch_linear_init(k6, in3, out3)
    out3_arr = jax.block_until_ready(
        linear_block(x3, w3, b3, activation="leaky_relu", tm=64, tn=128, tk=128))
    y3 = x3 @ w3.T + b3
    ref3 = jnp.where(y3 >= 0.0, y3, 0.01 * y3)
    assert out3_arr.shape == (n3, out3)
    assert jnp.allclose(out3_arr, ref3, atol=1e-3, rtol=1e-3)

    print("KERNEL_OK")
</pallas_src>

<mosaic_0001>
module attributes {stable_mosaic.version = 11 : i64} {
  func.func @_linear_single_k_kernel(%arg0: i32, %arg1: i32, %arg2: memref<16x128xf32, #tpu.memory_space<vmem>>, %arg3: memref<128x128xf32, #tpu.memory_space<vmem>>, %arg4: memref<1x128xf32, #tpu.memory_space<vmem>>, %arg5: memref<16x128xf32, #tpu.memory_space<vmem>>) attributes {dimension_semantics = [#tpu.dimension_semantics<parallel>, #tpu.dimension_semantics<parallel>], iteration_bounds = array<i64: 1, 1>, scalar_prefetch = 0 : i64, scratch_operands = 0 : i64, tpu.core_type = #tpu.core_type<tc>, window_params = [{transform_indices = @transform_0, window_bounds = array<i64: 16, 128>}, {transform_indices = @transform_1, window_bounds = array<i64: 128, 128>}, {transform_indices = @transform_2, window_bounds = array<i64: 1, 128>}, {transform_indices = @transform_3, window_bounds = array<i64: 16, 128>}]} {
    %c0 = arith.constant 0 : index
    %c0_0 = arith.constant 0 : index
    %0 = vector.load %arg2[%c0, %c0_0] : memref<16x128xf32, #tpu.memory_space<vmem>>, vector<16x128xf32>
    %c0_1 = arith.constant 0 : index
    %c0_2 = arith.constant 0 : index
    %1 = vector.load %arg3[%c0_1, %c0_2] : memref<128x128xf32, #tpu.memory_space<vmem>>, vector<128x128xf32>
    %cst = arith.constant dense<0.000000e+00> : vector<16x128xf32>
    %2 = tpu.matmul %0, %1, %cst {dimension_numbers = #tpu.dot_dimension_numbers<[1], [0], [0], [1], [0, 0, 1, 1], [], []>} : vector<16x128xf32>, vector<128x128xf32>, vector<16x128xf32> -> vector<16x128xf32>
    %c0_3 = arith.constant 0 : index
    %c0_4 = arith.constant 0 : index
    %3 = vector.load %arg4[%c0_3, %c0_4] : memref<1x128xf32, #tpu.memory_space<vmem>>, vector<1x128xf32>
    %4 = vector.broadcast %3 : vector<1x128xf32> to vector<16x128xf32>
    %5 = arith.addf %2, %4 : vector<16x128xf32>
    %cst_5 = arith.constant 0.000000e+00 : f32
    %6 = vector.broadcast %cst_5 : f32 to vector<16x128xf32>
    %7 = arith.maximumf %5, %6 : vector<16x128xf32>
    %c0_6 = arith.constant 0 : index
    %c0_7 = arith.constant 0 : index
    %8 = vector.load %arg5[%c0_6, %c0_7] : memref<16x128xf32, #tpu.memory_space<vmem>>, vector<16x128xf32>
    tpu.vector_store %arg5[%c0_6, %c0_7], %7 {strides = array<i32>} : memref<16x128xf32, #tpu.memory_space<vmem>>, vector<16x128xf32>,
    return
  }
  func.func @transform_0(%arg0: i32, %arg1: i32) -> (i32, i32) {
    %c0_i32 = arith.constant 0 : i32
    %c0_i32_0 = arith.constant 0 : i32
    return %arg0, %c0_i32 : i32, i32
  }
  func.func @transform_1(%arg0: i32, %arg1: i32) -> (i32, i32) {
    %c0_i32 = arith.constant 0 : i32
    %c0_i32_0 = arith.constant 0 : i32
    return %c0_i32, %arg1 : i32, i32
  }
  func.func @transform_2(%arg0: i32, %arg1: i32) -> (i32, i32) {
    %c0_i32 = arith.constant 0 : i32
    %c0_i32_0 = arith.constant 0 : i32
    return %c0_i32, %arg1 : i32, i32
  }
  func.func @transform_3(%arg0: i32, %arg1: i32) -> (i32, i32) {
    %c0_i32 = arith.constant 0 : i32
    return %arg0, %arg1 : i32, i32
  }
}

</mosaic_0001>

<llo_original>
// kernel: tpu_custom_call.1
$region0: #{tpu_custom_call.1}
  #allocation0 [shape = 'u32[]', space=smem, size = 0x4, offset = 0x4, fixed_abs, tag = 'smem constant byte address 0x4 - core index']
  #allocation1 [shape = 'u32[144,128]{1,0:T(1,128)}', space=vmem, size = 0x12000, scoped, tag = 'internal scratch']
  %s0 = inlined_call_operand.hbm [shape: f32[16,128], index: 0, kind: input, shape index: {}]
  %s1 = inlined_call_operand.hbm [shape: f32[128,128], index: 1, kind: input, shape index: {}]
  %s2 = inlined_call_operand.vmem [shape: f32[1,128], index: 2, kind: input, shape index: {}]
  %s3 = inlined_call_operand.hbm [shape: f32[16,128], index: 3, kind: output, shape index: {}]
  %s4 = sld [smem:[#allocation0]]
  $region30: #{tpu_custom_call.1} parent=0
    _
  %s6 = ssub.s32 1, %s4
  %s7 = scalar_select 0, %s6, %s4
  $region1: #{tpu_custom_call.1} parent=0
    #allocation2 [shape = 'u8[8192]{0}', space=vmem, size = 0x2000, scoped, tag = 'input window, operand 0, single buffered']
    #allocation3 [shape = 's32[1]{0}', space=sflag, size = 0x4, scoped, tag = 'scoped memory for tpu_custom_call.1']
    #allocation4 [shape = 's32[1]{0}', space=sflag, size = 0x4, scoped, tag = 'scoped memory for tpu_custom_call.1']
    #allocation5 [shape = 'u8[65536]{0}', space=vmem, size = 0x10000, scoped, tag = 'input window, operand 1, single buffered']
    #allocation6 [shape = 's32[1]{0}', space=sflag, size = 0x4, scoped, tag = 'scoped memory for tpu_custom_call.1']
    #allocation7 [shape = 'u8[8192]{0}', space=vmem, size = 0x2000, scoped, tag = 'output window, operand 0, single buffered']
    %8 = vsyncpa [#allocation3], 0
    %9 = vsyncpa [#allocation6], 0
    %10 = vsyncpa [#allocation4], 0
    // Predicated region
    $region2: #{tpu_custom_call.1} parent=1 // pred_check
      _
    $region3: #{tpu_custom_call.1} parent=1 // pred_check_branch
      %12 = sbr.rel (0) target = $region5
    $region4: #{tpu_custom_call.1} parent=1 // pred_region
      %s14 = ssub.s32 256, 256
      %15 = vsyncadd [#allocation3], %s14
      %s16 = sshll.u32 [#allocation2], 4
      %s17 = int_to_ptr.vmem [resolvable:$true] %s16
      %22 = dma.hbm_to_vmem [thread:$0]  %s0, 256, %s17, [#allocation3], 128, 128, 8
    $region5: #{tpu_custom_call.1} parent=1 // pred_fallthru
      _
    // Predicated region
    $region6: #{tpu_custom_call.1} parent=1 // pred_check
      _
    $region7: #{tpu_custom_call.1} parent=1 // pred_check_branch
      %24 = sbr.rel (0) target = $region9
    $region8: #{tpu_custom_call.1} parent=1 // pred_region
      %s26 = ssub.s32 2048, 2048
      %27 = vsyncadd [#allocation6], %s26
      %s28 = sshll.u32 [#allocation5], 4
      %s29 = int_to_ptr.vmem [resolvable:$true] %s28
      %34 = dma.hbm_to_vmem [thread:$0]  %s1, 2048, %s29, [#allocation6], 128, 128, 8
    $region9: #{tpu_custom_call.1} parent=1 // pred_fallthru
      _
    // Predicated region
    $region10: #{tpu_custom_call.1} parent=1 // pred_check
      _
    $region11: #{tpu_custom_call.1} parent=1 // pred_check_branch
      %36 = sbr.rel (0) target = $region13
    $region12: #{tpu_custom_call.1} parent=1 // pred_region
      _
    $region13: #{tpu_custom_call.1} parent=1 // pred_fallthru
      _
    // Predicated region
    $region14: #{tpu_custom_call.1} parent=1 // pred_check
      _
    $region15: #{tpu_custom_call.1} parent=1 // pred_check_branch
      %38 = sbr.rel (0) target = $region17
    $region16: #{tpu_custom_call.1} parent=1 // pred_region
      %39 = dma.done [#allocation3], 256
    $region17: #{tpu_custom_call.1} parent=1 // pred_fallthru
      _
    // Predicated region
    $region18: #{tpu_custom_call.1} parent=1 // pred_check
      _
    $region19: #{tpu_custom_call.1} parent=1 // pred_check_branch
      %41 = sbr.rel (0) target = $region21
    $region20: #{tpu_custom_call.1} parent=1 // pred_region
      %42 = dma.done [#allocation6], 2048
    $region21: #{tpu_custom_call.1} parent=1 // pred_fallthru
      _
    %v43 = vld [vmem:[#allocation2] sm:$0xff]
    %v44 = vld [vmem:[#allocation2 + $0x8] sm:$0xff]
    %v45 = vld [vmem:[#allocation5] sm:$0xff]
    %v46 = vld [vmem:[#allocation5 + $0x8] sm:$0xff]
    %v47 = vld [vmem:[#allocation5 + $0x10] sm:$0xff]
    %v48 = vld [vmem:[#allocation5 + $0x18] sm:$0xff]
    %v49 = vld [vmem:[#allocation5 + $0x20] sm:$0xff]
    %v50 = vld [vmem:[#allocation5 + $0x28] sm:$0xff]
    %v51 = vld [vmem:[#allocation5 + $0x30] sm:$0xff]
    %v52 = vld [vmem:[#allocation5 + $0x38] sm:$0xff]
    %v53 = vld [vmem:[#allocation5 + $0x40] sm:$0xff]
    %v54 = vld [vmem:[#allocation5 + $0x48] sm:$0xff]
    %v55 = vld [vmem:[#allocation5 + $0x50] sm:$0xff]
    %v56 = vld [vmem:[#allocation5 + $0x58] sm:$0xff]
    %v57 = vld [vmem:[#allocation5 + $0x60] sm:$0xff]
    %v58 = vld [vmem:[#allocation5 + $0x68] sm:$0xff]
    %v59 = vld [vmem:[#allocation5 + $0x70] sm:$0xff]
    %v60 = vld [vmem:[#allocation5 + $0x78] sm:$0xff]
    %v61 = vld [vmem:[%s2] sm:$0x1]
    %v63 = vlaneseq
    %v64 = vshrl.u32 %v63, 7
    %v65 = vsub.s32 0, %v64
    %v66 = vrot.slane %v61, %v65
    %68 = vmatprep.subr.mxu0 0.0
    %69 = vmatpush1.msra.mxu0 %v45
    %70 = vmatprep.subr.mxu0 0.0
    %71 = vmatpush1.msra.mxu0 %v46
    %72 = vmatprep.subr.mxu0 0.0
    %73 = vmatpush1.msra.mxu0 %v47
    %74 = vmatprep.subr.mxu0 0.0
    %75 = vmatpush1.msra.mxu0 %v48
    %76 = vmatprep.subr.mxu0 0.0
    %77 = vmatpush1.msra.mxu0 %v49
    %78 = vmatprep.subr.mxu0 0.0
    %79 = vmatpush1.msra.mxu0 %v50
    %80 = vmatprep.subr.mxu0 0.0
    %81 = vmatpush1.msra.mxu0 %v51
    %82 = vmatprep.subr.mxu0 0.0
    %83 = vmatpush1.msra.mxu0 %v52
    %84 = vmatprep.subr.mxu0 0.0
    %85 = vmatpush1.msra.mxu0 %v53
    %86 = vmatprep.subr.mxu0 0.0
    %87 = vmatpush1.msra.mxu0 %v54
    %88 = vmatprep.subr.mxu0 0.0
    %89 = vmatpush1.msra.mxu0 %v55
    %90 = vmatprep.subr.mxu0 0.0
    %91 = vmatpush1.msra.mxu0 %v56
    %92 = vmatprep.subr.mxu0 0.0
    %93 = vmatpush1.msra.mxu0 %v57
    %94 = vmatprep.subr.mxu0 0.0
    %95 = vmatpush1.msra.mxu0 %v58
    %96 = vmatprep.subr.mxu0 0.0
    %97 = vmatpush1.msra.mxu0 %v59
    %98 = vmatprep.subr.mxu0 0.0
    %99 = vmatpush1.msra.mxu0 %v60
    %100 = vmatprep.subr.mxu0 0.0
    %101 = vmatpush1.msra.mxu0 0.0
    %102 = vmatprep.subr.mxu0 0.0
    %103 = vmatpush1.msra.mxu0 0.0
    %104 = vmatprep.subr.mxu0 0.0
    %105 = vmatpush1.msra.mxu0 0.0
    %106 = vmatprep.subr.mxu0 0.0
    %107 = vmatpush1.msra.mxu0 0.0
    %108 = vmatprep.subr.mxu0 0.0
    %109 = vmatpush1.msra.mxu0 0.0
    %110 = vmatprep.subr.mxu0 0.0
    %111 = vmatpush1.msra.mxu0 0.0
    %112 = vmatprep.subr.mxu0 0.0
    %113 = vmatpush1.msra.mxu0 0.0
    %114 = vmatprep.subr.mxu0 0.0
    %115 = vmatpush1.msra.mxu0 0.0
    %116 = vmatprep.subr.mxu0 0.0
    %117 = vmatpush1.msra.mxu0 0.0
    %118 = vmatprep.subr.mxu0 0.0
    %119 = vmatpush1.msra.mxu0 0.0
    %120 = vmatprep.subr.mxu0 0.0
    %121 = vmatpush1.msra.mxu0 0.0
    %122 = vmatprep.subr.mxu0 0.0
    %123 = vmatpush1.msra.mxu0 0.0
    %124 = vmatprep.subr.mxu0 0.0
    %125 = vmatpush1.msra.mxu0 0.0
    %126 = vmatprep.subr.mxu0 0.0
    %127 = vmatpush1.msra.mxu0 0.0
    %128 = vmatprep.subr.mxu0 0.0
    %129 = vmatpush1.msra.mxu0 0.0
    %130 = vmatprep.subr.mxu0 0.0
    %131 = vmatpush1.msra.mxu0 0.0
    %132 = vmatprep.mubr.f32.mxu0 0.0
    %133 = vmatmul.mubr.f32.gmra.mrb[0].mxu0 %v43
    %v134 = vpop.f32.mrb[0].mxu0
    %v135 = vadd.f32 %v66, %v134
    %v136 = vpop.f32.mrb[0].mxu0
    %137 = vmatprep.mubr.f32.mxu0 0.0
    %138 = vmatmul.mubr.f32.gmra.mrb[0].mxu0 %v44
    %v139 = vpop.f32.mrb[0].mxu0
    %v140 = vadd.f32 %v66, %v139
    %v141 = vpop.f32.mrb[0].mxu0
    %142 = vdwg.mxu0
    %v143 = vmax.f32 %v135, 0.0
    %v144 = vmax.f32 %v140, 0.0
    %145 = vst [vmem:[#allocation7] sm:$0xff] %v143
    %146 = vst [vmem:[#allocation7 + $0x8] sm:$0xff] %v144
    // Predicated region
    $region22: #{tpu_custom_call.1} parent=1 // pred_check
      _
    $region23: #{tpu_custom_call.1} parent=1 // pred_check_branch
      %148 = sbr.rel (0) target = $region25
    $region24: #{tpu_custom_call.1} parent=1 // pred_region
      %s150 = ssub.s32 256, 256
      %151 = vsyncadd [#allocation4], %s150
      %s152 = sshll.u32 [#allocation7], 4
      %s153 = int_to_ptr.vmem [resolvable:$true] %s152
      %158 = dma.vmem_to_hbm [thread:$0]  %s153, 256, %s3, [#allocation4], 128, 128, 8
    $region25: #{tpu_custom_call.1} parent=1 // pred_fallthru
      _
    // Predicated region
    $region26: #{tpu_custom_call.1} parent=1 // pred_check
      _
    $region27: #{tpu_custom_call.1} parent=1 // pred_check_branch
      %160 = sbr.rel (0) target = $region29
    $region28: #{tpu_custom_call.1} parent=1 // pred_region
      %161 = dma.done [#allocation4], 256
    $region29: #{tpu_custom_call.1} parent=1 // pred_fallthru
      _
    %162 = vsyncpa [#allocation3], 1
    %163 = vsyncpa [#allocation6], 1
    %164 = vsyncpa [#allocation4], 1

</llo_original>
